<compile_context>
chip_gen: v7x
topology: tpu7x:2x2x1
jax: 0.10.0
libtpu: 0.0.40
codegen_flags: <defaults>
</compile_context>

<pallas_src>
import functools

import jax
import jax.numpy as jnp
from jax import lax
from jax.experimental import pallas as pl
from jax.experimental.pallas import tpu as pltpu


# Packed-weight layout inside one (96, 48) f32 block; every segment starts on an
# 8-sublane boundary so in-kernel window loads are vreg-aligned.
_W1_OFF = 0     # w1 augmented:  (11, 2)  = [[w1.T | b1.T]; [0, 1]]
_W2_OFF = 16    # w2 augmented:  (41, 11) = [[w2.T | b2.T]; [0..0, 1]]
_W3_OFF = 64    # w3 augmented:  (21, 41) = [[w3.T | b3.T]; [0..0, 1]]
_W4_OFF = 88    # w4 augmented:  (1, 21)  = [w4.T | b4]
_WB_ROWS = 96
_WB_COLS = 48


def mlp_kernel(xt_ref, wb_ref, ot_ref, *, chunk, n_chunks):
    # Hoist the tiny augmented weights once per grid step (weights are resident).
    w1a = wb_ref[_W1_OFF:_W1_OFF + 11, 0:2]     # (11, 2)
    w2a = wb_ref[_W2_OFF:_W2_OFF + 41, 0:11]    # (41, 11)
    w3a = wb_ref[_W3_OFF:_W3_OFF + 21, 0:41]    # (21, 41)
    w4a = wb_ref[_W4_OFF:_W4_OFF + 1, 0:21]     # (1, 21)

    def body(c, carry):
        off = pl.multiple_of(c * chunk, chunk)
        x2 = xt_ref[:, pl.ds(off, chunk)]                              # (2, chunk) = [x; 1]
        # fc1 (1->10) with b1 folded in; row 10 of h1 is the constant-1 carrier.
        h1 = jnp.maximum(
            jnp.dot(w1a, x2, preferred_element_type=jnp.float32), 0.0)  # (11, chunk)
        # fc2 (10->40) with b2 folded in via the extra K column.
        h2 = jnp.maximum(
            jnp.dot(w2a, h1, preferred_element_type=jnp.float32), 0.0)  # (41, chunk)
        # fc3 (40->20) with b3 folded in.
        h3 = jnp.maximum(
            jnp.dot(w3a, h2, preferred_element_type=jnp.float32), 0.0)  # (21, chunk)
        # fc4 (20->1) with b4 folded in; pure MXU, no VPU/XLU reduction.
        out = jnp.dot(w4a, h3, preferred_element_type=jnp.float32)      # (1, chunk)
        ot_ref[:, pl.ds(off, chunk)] = out.astype(ot_ref.dtype)
        return carry

    lax.fori_loop(0, n_chunks, body, 0)


def _round_up(x, m):
    return -(-x // m) * m


def _cdiv(x, m):
    return -(-x // m)


def _pack_weights(params):
    w1, b1 = params["w1"], params["b1"]   # (1, 10), (1, 10)
    w2, b2 = params["w2"], params["b2"]   # (10, 40), (1, 40)
    w3, b3 = params["w3"], params["b3"]   # (40, 20), (1, 20)
    w4, b4 = params["w4"], params["b4"]   # (20, 1), (1, 1)

    w1a = jnp.zeros((11, 2), jnp.float32)
    w1a = w1a.at[:10, 0].set(w1[0]).at[:10, 1].set(b1[0]).at[10, 1].set(1.0)
    w2a = jnp.zeros((41, 11), jnp.float32)
    w2a = w2a.at[:40, :10].set(w2.T).at[:40, 10].set(b2[0]).at[40, 10].set(1.0)
    w3a = jnp.zeros((21, 41), jnp.float32)
    w3a = w3a.at[:20, :40].set(w3.T).at[:20, 40].set(b3[0]).at[20, 40].set(1.0)
    w4a = jnp.zeros((1, 21), jnp.float32)
    w4a = w4a.at[0, :20].set(w4[:, 0]).at[0, 20].set(b4[0, 0])

    wb = jnp.zeros((_WB_ROWS, _WB_COLS), jnp.float32)
    wb = wb.at[_W1_OFF:_W1_OFF + 11, 0:2].set(w1a)
    wb = wb.at[_W2_OFF:_W2_OFF + 41, 0:11].set(w2a)
    wb = wb.at[_W3_OFF:_W3_OFF + 21, 0:41].set(w3a)
    wb = wb.at[_W4_OFF:_W4_OFF + 1, 0:21].set(w4a)
    return wb


def middle_sim_nn(x, params, *, max_tb=32768, chunk=512):
    """x: (B, 1) float32; params: weights (in, out) and biases (1, out)."""
    B = x.shape[0]
    b128 = _round_up(B, 128)
    if b128 <= chunk:
        # Tiny batch: one grid step, single chunk.
        tb = b128
        chunk = tb
        n_steps = 1
    else:
        b_c = _round_up(b128, chunk)
        # >= 2 balanced steps so v7x's two TensorCores both get work; each step
        # is at most max_tb lanes (x/out double buffers stay ~4 MiB at 32768).
        n_steps = max(2, _cdiv(b_c, max_tb))
        tb = _round_up(_cdiv(b_c, n_steps), chunk)
    b_pad = n_steps * tb
    n_chunks = tb // chunk

    # Transposed, padded, augmented input: row 0 = x values, row 1 = ones
    # (carrier for the folded biases). Padded columns compute finite garbage
    # that is sliced off at the end.
    xcol = jnp.pad(x[:, 0].astype(jnp.float32), (0, b_pad - B))
    xt2 = jnp.stack([xcol, jnp.ones_like(xcol)], axis=0)          # (2, b_pad)

    wb = _pack_weights(params)                                    # (96, 48)

    kernel = functools.partial(mlp_kernel, chunk=chunk, n_chunks=n_chunks)
    flops = 2 * (11 * 2 + 41 * 11 + 21 * 41 + 1 * 21) * b_pad
    ot = pl.pallas_call(
        kernel,
        out_shape=jax.ShapeDtypeStruct((1, b_pad), jnp.float32),
        grid=(n_steps,),
        in_specs=[
            pl.BlockSpec((2, tb), lambda i: (0, i)),              # [x; 1] tile (pipelined)
            pl.BlockSpec((_WB_ROWS, _WB_COLS), lambda i: (0, 0)),  # packed weights (resident)
        ],
        out_specs=pl.BlockSpec((1, tb), lambda i: (0, i)),        # lane-dense output
        compiler_params=pltpu.CompilerParams(
            dimension_semantics=("parallel",),
            vmem_limit_bytes=32 * 1024 * 1024),
        cost_estimate=pl.CostEstimate(
            flops=flops,
            transcendentals=0,
            bytes_accessed=3 * 4 * b_pad + _WB_ROWS * _WB_COLS * 4),
    )(xt2, wb)

    return ot[0, :B].reshape(B, 1)


def init_params(key):
    # Deterministic init mirroring nn.Linear shapes:
    # fc1: (1->10), fc2: (10->40), fc3: (40->20), fc4: (20->1).
    dims = [(1, 10), (10, 40), (40, 20), (20, 1)]
    params = {}
    for i, (fan_in, fan_out) in enumerate(dims, start=1):
        key, kw, kb = jax.random.split(key, 3)
        bound = 1.0 / jnp.sqrt(fan_in)
        params[f"w{i}"] = jax.random.uniform(
            kw, (fan_in, fan_out), jnp.float32, -bound, bound)
        params[f"b{i}"] = jax.random.uniform(
            kb, (1, fan_out), jnp.float32, -bound, bound)
    return params


def reference_forward(x, params):
    h = jnp.maximum(x @ params["w1"] + params["b1"], 0.0)
    h = jnp.maximum(h @ params["w2"] + params["b2"], 0.0)
    h = jnp.maximum(h @ params["w3"] + params["b3"], 0.0)
    return h @ params["w4"] + params["b4"]


if __name__ == "__main__":
    key = jax.random.PRNGKey(0)
    key, kx = jax.random.split(key)
    params = init_params(key)

    # Small shape consistent with the module (Linear(1, ...) -> input (B, 1)).
    batch = 8
    x = jax.random.normal(kx, (batch, 1), jnp.float32)
    out = middle_sim_nn(x, params)
    jax.block_until_ready(out)
    ref = reference_forward(x, params)
    assert out.shape == (batch, 1)
    assert jnp.allclose(out, ref, atol=1e-5, rtol=1e-5)

    # Second run exercising the multi-step grid + inner chunked loop path.
    key, kx2 = jax.random.split(key)
    x_big = jax.random.normal(kx2, (1920, 1), jnp.float32)
    out_big = middle_sim_nn(x_big, params)
    jax.block_until_ready(out_big)
    ref_big = reference_forward(x_big, params)
    assert out_big.shape == (1920, 1)
    assert jnp.allclose(out_big, ref_big, atol=1e-5, rtol=1e-5)

    print("KERNEL_OK")
</pallas_src>

<mosaic_0001>
module attributes {stable_mosaic.version = 11 : i64} {
  func.func @mlp_kernel(%arg0: i32, %arg1: memref<2x128xf32, #tpu.memory_space<vmem>>, %arg2: memref<96x48xf32, #tpu.memory_space<vmem>>, %arg3: memref<1x128xf32, #tpu.memory_space<vmem>>) attributes {dimension_semantics = [#tpu.dimension_semantics<parallel>], iteration_bounds = array<i64: 1>, scalar_prefetch = 0 : i64, scratch_operands = 0 : i64, tpu.core_type = #tpu.core_type<tc>, window_params = [{transform_indices = @transform_0, window_bounds = array<i64: 2, 128>}, {pipeline_mode = #tpu.pipeline_mode<synchronous>, transform_indices = @transform_1, window_bounds = array<i64: 96, 48>}, {transform_indices = @transform_2, window_bounds = array<i64: 1, 128>}]} {
    %c0 = arith.constant 0 : index
    %c0_0 = arith.constant 0 : index
    %0 = vector.load %arg2[%c0, %c0_0] : memref<96x48xf32, #tpu.memory_space<vmem>>, vector<11x2xf32>
    %c16 = arith.constant 16 : index
    %c0_1 = arith.constant 0 : index
    %1 = vector.load %arg2[%c16, %c0_1] : memref<96x48xf32, #tpu.memory_space<vmem>>, vector<41x11xf32>
    %c64 = arith.constant 64 : index
    %c0_2 = arith.constant 0 : index
    %2 = vector.load %arg2[%c64, %c0_2] : memref<96x48xf32, #tpu.memory_space<vmem>>, vector<21x41xf32>
    %c88 = arith.constant 88 : index
    %c0_3 = arith.constant 0 : index
    %3 = vector.load %arg2[%c88, %c0_3] : memref<96x48xf32, #tpu.memory_space<vmem>>, vector<1x21xf32>
    %c0_i32 = arith.constant 0 : i32
    %c128_i32 = arith.constant 128 : i32
    %4 = arith.muli %c0_i32, %c128_i32 : i32
    %5 = tpu.assume_multiple %4, 128 : i32
    %c0_4 = arith.constant 0 : index
    %6 = arith.index_cast %5 : i32 to index
    %7 = vector.load %arg1[%c0_4, %6] : memref<2x128xf32, #tpu.memory_space<vmem>>, vector<2x128xf32>
    %cst = arith.constant dense<0.000000e+00> : vector<11x128xf32>
    %8 = tpu.matmul %0, %7, %cst {dimension_numbers = #tpu.dot_dimension_numbers<[1], [0], [0], [1], [0, 0, 1, 1], [], []>} : vector<11x2xf32>, vector<2x128xf32>, vector<11x128xf32> -> vector<11x128xf32>
    %cst_5 = arith.constant 0.000000e+00 : f32
    %9 = vector.broadcast %cst_5 : f32 to vector<11x128xf32>
    %10 = arith.maximumf %8, %9 : vector<11x128xf32>
    %cst_6 = arith.constant dense<0.000000e+00> : vector<41x128xf32>
    %11 = tpu.matmul %1, %10, %cst_6 {dimension_numbers = #tpu.dot_dimension_numbers<[1], [0], [0], [1], [0, 0, 1, 1], [], []>} : vector<41x11xf32>, vector<11x128xf32>, vector<41x128xf32> -> vector<41x128xf32>
    %cst_7 = arith.constant 0.000000e+00 : f32
    %12 = vector.broadcast %cst_7 : f32 to vector<41x128xf32>
    %13 = arith.maximumf %11, %12 : vector<41x128xf32>
    %cst_8 = arith.constant dense<0.000000e+00> : vector<21x128xf32>
    %14 = tpu.matmul %2, %13, %cst_8 {dimension_numbers = #tpu.dot_dimension_numbers<[1], [0], [0], [1], [0, 0, 1, 1], [], []>} : vector<21x41xf32>, vector<41x128xf32>, vector<21x128xf32> -> vector<21x128xf32>
    %cst_9 = arith.constant 0.000000e+00 : f32
    %15 = vector.broadcast %cst_9 : f32 to vector<21x128xf32>
    %16 = arith.maximumf %14, %15 : vector<21x128xf32>
    %cst_10 = arith.constant dense<0.000000e+00> : vector<1x128xf32>
    %17 = tpu.matmul %3, %16, %cst_10 {dimension_numbers = #tpu.dot_dimension_numbers<[1], [0], [0], [1], [0, 0, 1, 1], [], []>} : vector<1x21xf32>, vector<21x128xf32>, vector<1x128xf32> -> vector<1x128xf32>
    %c0_11 = arith.constant 0 : index
    %18 = arith.index_cast %5 : i32 to index
    %19 = vector.load %arg3[%c0_11, %18] : memref<1x128xf32, #tpu.memory_space<vmem>>, vector<1x128xf32>
    tpu.vector_store %arg3[%c0_11, %18], %17 {strides = array<i32>} : memref<1x128xf32, #tpu.memory_space<vmem>>, vector<1x128xf32>,
    %c1_i32 = arith.constant 1 : i32
    return
  }
  func.func @transform_0(%arg0: i32) -> (i32, i32) {
    %c0_i32 = arith.constant 0 : i32
    %c0_i32_0 = arith.constant 0 : i32
    return %c0_i32, %arg0 : i32, i32
  }
  func.func @transform_1(%arg0: i32) -> (i32, i32) {
    %c0_i32 = arith.constant 0 : i32
    %c0_i32_0 = arith.constant 0 : i32
    %c0_i32_1 = arith.constant 0 : i32
    return %c0_i32, %c0_i32_0 : i32, i32
  }
  func.func @transform_2(%arg0: i32) -> (i32, i32) {
    %c0_i32 = arith.constant 0 : i32
    %c0_i32_0 = arith.constant 0 : i32
    return %c0_i32, %arg0 : i32, i32
  }
}

</mosaic_0001>

<llo_original>
// kernel: tpu_custom_call.1
$region0: #{tpu_custom_call.1}
  #allocation0 [shape = 'u32[]', space=smem, size = 0x4, offset = 0x4, fixed_abs, tag = 'smem constant byte address 0x4 - core index']
  #allocation1 [shape = 'u32[144,128]{1,0:T(1,128)}', space=vmem, size = 0x12000, scoped, tag = 'internal scratch']
  %s0 = inlined_call_operand.vmem [shape: f32[2,128], index: 0, kind: input, shape index: {}]
  %s1 = inlined_call_operand.vmem [shape: f32[96,48], index: 1, kind: input, shape index: {}]
  %s2 = inlined_call_operand.hbm [shape: f32[1,128], index: 2, kind: output, shape index: {}]
  %s3 = sld [smem:[#allocation0]]
  $region18: #{tpu_custom_call.1} parent=0
    _
  %s5 = ssub.s32 1, %s3
  %s6 = scalar_select 0, %s5, %s3
  $region1: #{tpu_custom_call.1} parent=0
    #allocation2 [shape = 'u8[512]{0}', space=vmem, size = 0x400, scoped, tag = 'output window, operand 0, single buffered']
    #allocation3 [shape = 's32[1]{0}', space=sflag, size = 0x4, scoped, tag = 'scoped memory for tpu_custom_call.1']
    %7 = vsyncpa [#allocation3], 0
    // Predicated region
    $region2: #{tpu_custom_call.1} parent=1 // pred_check
      _
    $region3: #{tpu_custom_call.1} parent=1 // pred_check_branch
      %9 = sbr.rel (0) target = $region5
    $region4: #{tpu_custom_call.1} parent=1 // pred_region
      _
    $region5: #{tpu_custom_call.1} parent=1 // pred_fallthru
      _
    // Predicated region
    $region6: #{tpu_custom_call.1} parent=1 // pred_check
      _
    $region7: #{tpu_custom_call.1} parent=1 // pred_check_branch
      %11 = sbr.rel (0) target = $region9
    $region8: #{tpu_custom_call.1} parent=1 // pred_region
      _
    $region9: #{tpu_custom_call.1} parent=1 // pred_fallthru
      _
    %v12 = vld [vmem:[%s1] sm:$0xff]
    %v13 = vld [vmem:[%s1 + $0x8] sm:$0x7]
    %v14 = vld [vmem:[%s1 + $0x10] sm:$0xff]
    %v15 = vld [vmem:[%s1 + $0x18] sm:$0xff]
    %v16 = vld [vmem:[%s1 + $0x20] sm:$0xff]
    %v17 = vld [vmem:[%s1 + $0x28] sm:$0xff]
    %v18 = vld [vmem:[%s1 + $0x30] sm:$0xff]
    %v19 = vld [vmem:[%s1 + $0x38] sm:$0x1]
    %v20 = vld [vmem:[%s1 + $0x40] sm:$0xff]
    %v21 = vld [vmem:[%s1 + $0x48] sm:$0xff]
    %v22 = vld [vmem:[%s1 + $0x50] sm:$0x1f]
    %v23 = vld [vmem:[%s1 + $0x58] sm:$0x1]
    %v24 = vld [vmem:[%s0] sm:$0x3]
    %vm25 = vcmask 15360
    %v27 = vsel %vm25, %v12, 0
    %v30 = vsel %vm25, %v13, 0
    %vm32 = vcmask 1041408
    %v34 = vsel %vm32, %v24, 0
    %36 = vmatprep.subr.mxu0 0.0
    %37 = vmatpush1.msra.mxu0 %v34
    %38 = vmatprep.subr.mxu0 0.0
    %39 = vmatpush1.msra.mxu0 0.0
    %40 = vmatprep.subr.mxu0 0.0
    %41 = vmatpush1.msra.mxu0 0.0
    %42 = vmatprep.subr.mxu0 0.0
    %43 = vmatpush1.msra.mxu0 0.0
    %44 = vmatprep.subr.mxu0 0.0
    %45 = vmatpush1.msra.mxu0 0.0
    %46 = vmatprep.subr.mxu0 0.0
    %47 = vmatpush1.msra.mxu0 0.0
    %48 = vmatprep.subr.mxu0 0.0
    %49 = vmatpush1.msra.mxu0 0.0
    %50 = vmatprep.subr.mxu0 0.0
    %51 = vmatpush1.msra.mxu0 0.0
    %52 = vmatprep.subr.mxu0 0.0
    %53 = vmatpush1.msra.mxu0 0.0
    %54 = vmatprep.subr.mxu0 0.0
    %55 = vmatpush1.msra.mxu0 0.0
    %56 = vmatprep.subr.mxu0 0.0
    %57 = vmatpush1.msra.mxu0 0.0
    %58 = vmatprep.subr.mxu0 0.0
    %59 = vmatpush1.msra.mxu0 0.0
    %60 = vmatprep.subr.mxu0 0.0
    %61 = vmatpush1.msra.mxu0 0.0
    %62 = vmatprep.subr.mxu0 0.0
    %63 = vmatpush1.msra.mxu0 0.0
    %64 = vmatprep.subr.mxu0 0.0
    %65 = vmatpush1.msra.mxu0 0.0
    %66 = vmatprep.subr.mxu0 0.0
    %67 = vmatpush1.msra.mxu0 0.0
    %68 = vmatprep.subr.mxu0 0.0
    %69 = vmatpush1.msra.mxu0 0.0
    %70 = vmatprep.subr.mxu0 0.0
    %71 = vmatpush1.msra.mxu0 0.0
    %72 = vmatprep.subr.mxu0 0.0
    %73 = vmatpush1.msra.mxu0 0.0
    %74 = vmatprep.subr.mxu0 0.0
    %75 = vmatpush1.msra.mxu0 0.0
    %76 = vmatprep.subr.mxu0 0.0
    %77 = vmatpush1.msra.mxu0 0.0
    %78 = vmatprep.subr.mxu0 0.0
    %79 = vmatpush1.msra.mxu0 0.0
    %80 = vmatprep.subr.mxu0 0.0
    %81 = vmatpush1.msra.mxu0 0.0
    %82 = vmatprep.subr.mxu0 0.0
    %83 = vmatpush1.msra.mxu0 0.0
    %84 = vmatprep.subr.mxu0 0.0
    %85 = vmatpush1.msra.mxu0 0.0
    %86 = vmatprep.subr.mxu0 0.0
    %87 = vmatpush1.msra.mxu0 0.0
    %88 = vmatprep.subr.mxu0 0.0
    %89 = vmatpush1.msra.mxu0 0.0
    %90 = vmatprep.subr.mxu0 0.0
    %91 = vmatpush1.msra.mxu0 0.0
    %92 = vmatprep.subr.mxu0 0.0
    %93 = vmatpush1.msra.mxu0 0.0
    %94 = vmatprep.subr.mxu0 0.0
    %95 = vmatpush1.msra.mxu0 0.0
    %96 = vmatprep.subr.mxu0 0.0
    %97 = vmatpush1.msra.mxu0 0.0
    %98 = vmatprep.subr.mxu0 0.0
    %99 = vmatpush1.msra.mxu0 0.0
    %100 = vmatprep.mubr.f32.mxu0 0.0
    %101 = vmatmul.mubr.f32.gmra.mrb[0].mxu0 %v27
    %v102 = vpop.f32.mrb[0].mxu0
    %v103 = vadd.f32 0.0, %v102
    %v104 = vpop.f32.mrb[0].mxu0
    %105 = vmatprep.mubr.f32.mxu0 0.0
    %106 = vmatmul.mubr.f32.gmra.mrb[0].mxu0 %v30
    %v107 = vpop.f32.mrb[0].mxu0
    %v108 = vadd.f32 0.0, %v107
    %v109 = vpop.f32.mrb[0].mxu0
    %110 = vdwg.mxu0
    %v111 = vmax.f32 %v103, 0.0
    %v112 = vmax.f32 %v108, 0.0
    %vm113 = vcmask 89088
    %v115 = vsel %vm113, %v14, 0
    %v118 = vsel %vm113, %v15, 0
    %v121 = vsel %vm113, %v16, 0
    %v124 = vsel %vm113, %v17, 0
    %v127 = vsel %vm113, %v18, 0
    %v130 = vsel %vm113, %v19, 0
    %vm132 = vcmask 1042432
    %v134 = vsel %vm132, %v112, 0
    %136 = vmatprep.subr.mxu0 0.0
    %137 = vmatpush1.msra.mxu0 %v111
    %138 = vmatprep.subr.mxu0 0.0
    %139 = vmatpush1.msra.mxu0 %v134
    %140 = vmatprep.subr.mxu0 0.0
    %141 = vmatpush1.msra.mxu0 0.0
    %142 = vmatprep.subr.mxu0 0.0
    %143 = vmatpush1.msra.mxu0 0.0
    %144 = vmatprep.subr.mxu0 0.0
    %145 = vmatpush1.msra.mxu0 0.0
    %146 = vmatprep.subr.mxu0 0.0
    %147 = vmatpush1.msra.mxu0 0.0
    %148 = vmatprep.subr.mxu0 0.0
    %149 = vmatpush1.msra.mxu0 0.0
    %150 = vmatprep.subr.mxu0 0.0
    %151 = vmatpush1.msra.mxu0 0.0
    %152 = vmatprep.subr.mxu0 0.0
    %153 = vmatpush1.msra.mxu0 0.0
    %154 = vmatprep.subr.mxu0 0.0
    %155 = vmatpush1.msra.mxu0 0.0
    %156 = vmatprep.subr.mxu0 0.0
    %157 = vmatpush1.msra.mxu0 0.0
    %158 = vmatprep.subr.mxu0 0.0
    %159 = vmatpush1.msra.mxu0 0.0
    %160 = vmatprep.subr.mxu0 0.0
    %161 = vmatpush1.msra.mxu0 0.0
    %162 = vmatprep.subr.mxu0 0.0
    %163 = vmatpush1.msra.mxu0 0.0
    %164 = vmatprep.subr.mxu0 0.0
    %165 = vmatpush1.msra.mxu0 0.0
    %166 = vmatprep.subr.mxu0 0.0
    %167 = vmatpush1.msra.mxu0 0.0
    %168 = vmatprep.subr.mxu0 0.0
    %169 = vmatpush1.msra.mxu0 0.0
    %170 = vmatprep.subr.mxu0 0.0
    %171 = vmatpush1.msra.mxu0 0.0
    %172 = vmatprep.subr.mxu0 0.0
    %173 = vmatpush1.msra.mxu0 0.0
    %174 = vmatprep.subr.mxu0 0.0
    %175 = vmatpush1.msra.mxu0 0.0
    %176 = vmatprep.subr.mxu0 0.0
    %177 = vmatpush1.msra.mxu0 0.0
    %178 = vmatprep.subr.mxu0 0.0
    %179 = vmatpush1.msra.mxu0 0.0
    %180 = vmatprep.subr.mxu0 0.0
    %181 = vmatpush1.msra.mxu0 0.0
    %182 = vmatprep.subr.mxu0 0.0
    %183 = vmatpush1.msra.mxu0 0.0
    %184 = vmatprep.subr.mxu0 0.0
    %185 = vmatpush1.msra.mxu0 0.0
    %186 = vmatprep.subr.mxu0 0.0
    %187 = vmatpush1.msra.mxu0 0.0
    %188 = vmatprep.subr.mxu0 0.0
    %189 = vmatpush1.msra.mxu0 0.0
    %190 = vmatprep.subr.mxu0 0.0
    %191 = vmatpush1.msra.mxu0 0.0
    %192 = vmatprep.subr.mxu0 0.0
    %193 = vmatpush1.msra.mxu0 0.0
    %194 = vmatprep.subr.mxu0 0.0
    %195 = vmatpush1.msra.mxu0 0.0
    %196 = vmatprep.subr.mxu0 0.0
    %197 = vmatpush1.msra.mxu0 0.0
    %198 = vmatprep.subr.mxu0 0.0
    %199 = vmatpush1.msra.mxu0 0.0
    %200 = vmatprep.mubr.f32.mxu0 0.0
    %201 = vmatmul.mubr.f32.gmra.mrb[0].mxu0 %v115
    %v202 = vpop.f32.mrb[0].mxu0
    %v203 = vadd.f32 0.0, %v202
    %v204 = vpop.f32.mrb[0].mxu0
    %205 = vmatprep.mubr.f32.mxu0 0.0
    %206 = vmatmul.mubr.f32.gmra.mrb[0].mxu0 %v118
    %v207 = vpop.f32.mrb[0].mxu0
    %v208 = vadd.f32 0.0, %v207
    %v209 = vpop.f32.mrb[0].mxu0
    %210 = vmatprep.mubr.f32.mxu0 0.0
    %211 = vmatmul.mubr.f32.gmra.mrb[0].mxu0 %v121
    %v212 = vpop.f32.mrb[0].mxu0
    %v213 = vadd.f32 0.0, %v212
    %v214 = vpop.f32.mrb[0].mxu0
    %215 = vmatprep.mubr.f32.mxu0 0.0
    %216 = vmatmul.mubr.f32.gmra.mrb[0].mxu0 %v124
    %v217 = vpop.f32.mrb[0].mxu0
    %v218 = vadd.f32 0.0, %v217
    %v219 = vpop.f32.mrb[0].mxu0
    %220 = vmatprep.mubr.f32.mxu0 0.0
    %221 = vmatmul.mubr.f32.gmra.mrb[0].mxu0 %v127
    %v222 = vpop.f32.mrb[0].mxu0
    %v223 = vadd.f32 0.0, %v222
    %v224 = vpop.f32.mrb[0].mxu0
    %225 = vmatprep.mubr.f32.mxu0 0.0
    %226 = vmatmul.mubr.f32.gmra.mrb[0].mxu0 %v130
    %v227 = vpop.f32.mrb[0].mxu0
    %v228 = vadd.f32 0.0, %v227
    %v229 = vpop.f32.mrb[0].mxu0
    %230 = vdwg.mxu0
    %v231 = vmax.f32 %v203, 0.0
    %v232 = vmax.f32 %v208, 0.0
    %v233 = vmax.f32 %v213, 0.0
    %v234 = vmax.f32 %v218, 0.0
    %v235 = vmax.f32 %v223, 0.0
    %v236 = vmax.f32 %v228, 0.0
    %vm237 = vcmask 334848
    %v239 = vsel %vm237, %v20, 0
    %v242 = vsel %vm237, %v21, 0
    %v245 = vsel %vm237, %v22, 0
    %vm247 = vcmask 1040384
    %v249 = vsel %vm247, %v236, 0
    %251 = vmatprep.subr.mxu0 0.0
    %252 = vmatpush1.msra.mxu0 %v231
    %253 = vmatprep.subr.mxu0 0.0
    %254 = vmatpush1.msra.mxu0 %v232
    %255 = vmatprep.subr.mxu0 0.0
    %256 = vmatpush1.msra.mxu0 %v233
    %257 = vmatprep.subr.mxu0 0.0
    %258 = vmatpush1.msra.mxu0 %v234
    %259 = vmatprep.subr.mxu0 0.0
    %260 = vmatpush1.msra.mxu0 %v235
    %261 = vmatprep.subr.mxu0 0.0
    %262 = vmatpush1.msra.mxu0 %v249
    %263 = vmatprep.subr.mxu0 0.0
    %264 = vmatpush1.msra.mxu0 0.0
    %265 = vmatprep.subr.mxu0 0.0
    %266 = vmatpush1.msra.mxu0 0.0
    %267 = vmatprep.subr.mxu0 0.0
    %268 = vmatpush1.msra.mxu0 0.0
    %269 = vmatprep.subr.mxu0 0.0
    %270 = vmatpush1.msra.mxu0 0.0
    %271 = vmatprep.subr.mxu0 0.0
    %272 = vmatpush1.msra.mxu0 0.0
    %273 = vmatprep.subr.mxu0 0.0
    %274 = vmatpush1.msra.mxu0 0.0
    %275 = vmatprep.subr.mxu0 0.0
    %276 = vmatpush1.msra.mxu0 0.0
    %277 = vmatprep.subr.mxu0 0.0
    %278 = vmatpush1.msra.mxu0 0.0
    %279 = vmatprep.subr.mxu0 0.0
    %280 = vmatpush1.msra.mxu0 0.0
    %281 = vmatprep.subr.mxu0 0.0
    %282 = vmatpush1.msra.mxu0 0.0
    %283 = vmatprep.subr.mxu0 0.0
    %284 = vmatpush1.msra.mxu0 0.0
    %285 = vmatprep.subr.mxu0 0.0
    %286 = vmatpush1.msra.mxu0 0.0
    %287 = vmatprep.subr.mxu0 0.0
    %288 = vmatpush1.msra.mxu0 0.0
    %289 = vmatprep.subr.mxu0 0.0
    %290 = vmatpush1.msra.mxu0 0.0
    %291 = vmatprep.subr.mxu0 0.0
    %292 = vmatpush1.msra.mxu0 0.0
    %293 = vmatprep.subr.mxu0 0.0
    %294 = vmatpush1.msra.mxu0 0.0
    %295 = vmatprep.subr.mxu0 0.0
    %296 = vmatpush1.msra.mxu0 0.0
    %297 = vmatprep.subr.mxu0 0.0
    %298 = vmatpush1.msra.mxu0 0.0
    %299 = vmatprep.subr.mxu0 0.0
    %300 = vmatpush1.msra.mxu0 0.0
    %301 = vmatprep.subr.mxu0 0.0
    %302 = vmatpush1.msra.mxu0 0.0
    %303 = vmatprep.subr.mxu0 0.0
    %304 = vmatpush1.msra.mxu0 0.0
    %305 = vmatprep.subr.mxu0 0.0
    %306 = vmatpush1.msra.mxu0 0.0
    %307 = vmatprep.subr.mxu0 0.0
    %308 = vmatpush1.msra.mxu0 0.0
    %309 = vmatprep.subr.mxu0 0.0
    %310 = vmatpush1.msra.mxu0 0.0
    %311 = vmatprep.subr.mxu0 0.0
    %312 = vmatpush1.msra.mxu0 0.0
    %313 = vmatprep.subr.mxu0 0.0
    %314 = vmatpush1.msra.mxu0 0.0
    %315 = vmatprep.mubr.f32.mxu0 0.0
    %316 = vmatmul.mubr.f32.gmra.mrb[0].mxu0 %v239
    %v317 = vpop.f32.mrb[0].mxu0
    %v318 = vadd.f32 0.0, %v317
    %v319 = vpop.f32.mrb[0].mxu0
    %320 = vmatprep.mubr.f32.mxu0 0.0
    %321 = vmatmul.mubr.f32.gmra.mrb[0].mxu0 %v242
    %v322 = vpop.f32.mrb[0].mxu0
    %v323 = vadd.f32 0.0, %v322
    %v324 = vpop.f32.mrb[0].mxu0
    %325 = vmatprep.mubr.f32.mxu0 0.0
    %326 = vmatmul.mubr.f32.gmra.mrb[0].mxu0 %v245
    %v327 = vpop.f32.mrb[0].mxu0
    %v328 = vadd.f32 0.0, %v327
    %v329 = vpop.f32.mrb[0].mxu0
    %330 = vdwg.mxu0
    %v331 = vmax.f32 %v318, 0.0
    %v332 = vmax.f32 %v323, 0.0
    %v333 = vmax.f32 %v328, 0.0
    %vm334 = vcmask 171008
    %v336 = vsel %vm334, %v23, 0
    %vm338 = vcmask 1044480
    %v340 = vsel %vm338, %v333, 0
    %342 = vmatprep.subr.mxu0 0.0
    %343 = vmatpush1.msra.mxu0 %v331
    %344 = vmatprep.subr.mxu0 0.0
    %345 = vmatpush1.msra.mxu0 %v332
    %346 = vmatprep.subr.mxu0 0.0
    %347 = vmatpush1.msra.mxu0 %v340
    %348 = vmatprep.subr.mxu0 0.0
    %349 = vmatpush1.msra.mxu0 0.0
    %350 = vmatprep.subr.mxu0 0.0
    %351 = vmatpush1.msra.mxu0 0.0
    %352 = vmatprep.subr.mxu0 0.0
    %353 = vmatpush1.msra.mxu0 0.0
    %354 = vmatprep.subr.mxu0 0.0
    %355 = vmatpush1.msra.mxu0 0.0
    %356 = vmatprep.subr.mxu0 0.0
    %357 = vmatpush1.msra.mxu0 0.0
    %358 = vmatprep.subr.mxu0 0.0
    %359 = vmatpush1.msra.mxu0 0.0
    %360 = vmatprep.subr.mxu0 0.0
    %361 = vmatpush1.msra.mxu0 0.0
    %362 = vmatprep.subr.mxu0 0.0
    %363 = vmatpush1.msra.mxu0 0.0
    %364 = vmatprep.subr.mxu0 0.0
    %365 = vmatpush1.msra.mxu0 0.0
    %366 = vmatprep.subr.mxu0 0.0
    %367 = vmatpush1.msra.mxu0 0.0
    %368 = vmatprep.subr.mxu0 0.0
    %369 = vmatpush1.msra.mxu0 0.0
    %370 = vmatprep.subr.mxu0 0.0
    %371 = vmatpush1.msra.mxu0 0.0
    %372 = vmatprep.subr.mxu0 0.0
    %373 = vmatpush1.msra.mxu0 0.0
    %374 = vmatprep.subr.mxu0 0.0
    %375 = vmatpush1.msra.mxu0 0.0
    %376 = vmatprep.subr.mxu0 0.0
    %377 = vmatpush1.msra.mxu0 0.0
    %378 = vmatprep.subr.mxu0 0.0
    %379 = vmatpush1.msra.mxu0 0.0
    %380 = vmatprep.subr.mxu0 0.0
    %381 = vmatpush1.msra.mxu0 0.0
    %382 = vmatprep.subr.mxu0 0.0
    %383 = vmatpush1.msra.mxu0 0.0
    %384 = vmatprep.subr.mxu0 0.0
    %385 = vmatpush1.msra.mxu0 0.0
    %386 = vmatprep.subr.mxu0 0.0
    %387 = vmatpush1.msra.mxu0 0.0
    %388 = vmatprep.subr.mxu0 0.0
    %389 = vmatpush1.msra.mxu0 0.0
    %390 = vmatprep.subr.mxu0 0.0
    %391 = vmatpush1.msra.mxu0 0.0
    %392 = vmatprep.subr.mxu0 0.0
    %393 = vmatpush1.msra.mxu0 0.0
    %394 = vmatprep.subr.mxu0 0.0
    %395 = vmatpush1.msra.mxu0 0.0
    %396 = vmatprep.subr.mxu0 0.0
    %397 = vmatpush1.msra.mxu0 0.0
    %398 = vmatprep.subr.mxu0 0.0
    %399 = vmatpush1.msra.mxu0 0.0
    %400 = vmatprep.subr.mxu0 0.0
    %401 = vmatpush1.msra.mxu0 0.0
    %402 = vmatprep.subr.mxu0 0.0
    %403 = vmatpush1.msra.mxu0 0.0
    %404 = vmatprep.subr.mxu0 0.0
    %405 = vmatpush1.msra.mxu0 0.0
    %406 = vmatprep.mubr.f32.mxu0 0.0
    %407 = vmatmul.mubr.f32.gmra.mrb[0].mxu0 %v336
    %v408 = vpop.f32.mrb[0].mxu0
    %v409 = vadd.f32 0.0, %v408
    %v410 = vpop.f32.mrb[0].mxu0
    %411 = vdwg.mxu0
    %412 = vst [vmem:[#allocation2] sm:$0x1] %v409
    // Predicated region
    $region10: #{tpu_custom_call.1} parent=1 // pred_check
      _
    $region11: #{tpu_custom_call.1} parent=1 // pred_check_branch
      %414 = sbr.rel (0) target = $region13
    $region12: #{tpu_custom_call.1} parent=1 // pred_region
      %s416 = ssub.s32 16, 16
      %417 = vsyncadd [#allocation3], %s416
      %s419 = sshll.u32 [#allocation2], 4
      %s420 = int_to_ptr.vmem [resolvable:$true] %s419
      %422 = dma.vmem_to_hbm [thread:$0]  %s420, 16, %s2, [#allocation3]
    $region13: #{tpu_custom_call.1} parent=1 // pred_fallthru
      _
    // Predicated region
    $region14: #{tpu_custom_call.1} parent=1 // pred_check
      _
    $region15: #{tpu_custom_call.1} parent=1 // pred_check_branch
      %424 = sbr.rel (0) target = $region17
    $region16: #{tpu_custom_call.1} parent=1 // pred_region
      %425 = dma.done [#allocation3], 16
    $region17: #{tpu_custom_call.1} parent=1 // pred_fallthru
      _
    %426 = vsyncpa [#allocation3], 1

</llo_original>
